<compile_context>
chip_gen: v6e
topology: v6e:2x2x1
jax: 0.10.0
libtpu: 0.0.40
codegen_flags: <defaults>
</compile_context>

<pallas_src>
import functools

import jax
import jax.numpy as jnp
from jax.experimental import pallas as pl
from jax.experimental.pallas import tpu as pltpu


def _focal_kernel(preds_ref, masks_ref, out_ref, acc_ref, *,
                  gamma, alpha_tuple, scalar_alpha, hw, tile, n_inner, approx):
    o = pl.program_id(1)
    j = pl.program_id(2)

    @pl.when(j == 0)
    def _():
        acc_ref[...] = jnp.zeros_like(acc_ref)

    x = preds_ref[0].astype(jnp.float32)          # (C, T)  classes on sublanes
    mask = masks_ref[0].astype(jnp.int32)         # (1, T)
    num_c = x.shape[0]
    t = x.shape[1]

    # one-hot match of each class row against the target class
    cls_idx = jax.lax.broadcasted_iota(jnp.int32, (num_c, t), 0)  # (C, T)
    match = cls_idx == mask                                        # (C, T) bool

    # numerically-stable softmax pieces along the class (sublane) axis
    m = jnp.max(x, axis=0, keepdims=True)                          # (1, T)
    e = jnp.exp(x - m)                                             # (C, T) 1 exp
    s = jnp.sum(e, axis=0, keepdims=True)                          # (1, T)
    lse = m + jnp.log(s)                                           # (1, T) 1 log

    # gather raw target logit / target exp (no (C,T) logp_all intermediate)
    x_t = jnp.sum(jnp.where(match, x, 0.0), axis=0, keepdims=True)  # (1, T)
    e_t = jnp.sum(jnp.where(match, e, 0.0), axis=0, keepdims=True)  # (1, T)

    logp = x_t - lse                                               # (1, T)
    # p = softmax prob of the target class, reusing e/s (no dependent exp)
    p = e_t * pl.reciprocal(s, approx=approx)                      # (1, T)

    # per-class alpha
    if scalar_alpha:
        alpha_t = jnp.where(mask == 0,
                            jnp.float32(alpha_tuple[0]),
                            jnp.float32(alpha_tuple[1]))           # 1 select
    else:
        # Build a tiny (C, 1) alpha column (C-element selects, not per-pixel),
        # then fold it through the same one-hot match used for the gathers.
        cls_col = jax.lax.broadcasted_iota(jnp.int32, (num_c, 1), 0)
        alpha_col = jnp.full((num_c, 1), jnp.float32(alpha_tuple[0]),
                             dtype=jnp.float32)
        for c in range(1, num_c):
            alpha_col = jnp.where(cls_col == c, jnp.float32(alpha_tuple[c]),
                                  alpha_col)
        alpha_t = jnp.sum(jnp.where(match, alpha_col, 0.0),
                          axis=0, keepdims=True)                   # (1, T)

    # focal modulation: integer gamma -> repeated multiplies (VPU), else pow
    one_minus_p = 1.0 - p
    if float(gamma) == int(gamma) and 0 <= int(gamma) <= 16:
        g = int(gamma)
        if g == 0:
            focal = jnp.ones_like(one_minus_p)
        else:
            focal = one_minus_p
            for _ in range(g - 1):
                focal = focal * one_minus_p
    else:
        focal = jnp.power(one_minus_p, jnp.float32(gamma))

    loss = -alpha_t * focal * logp                                 # (1, T)

    # NaN-safe mask of lanes past the true H*W extent (no wrapper padding).
    # Must stay AFTER all tail-dependent math.
    col = (jax.lax.broadcasted_iota(jnp.int32, loss.shape, 1)
           + (o * n_inner + j) * tile)
    loss = jnp.where(col < hw, loss, 0.0)

    acc_ref[...] += loss

    @pl.when(j == pl.num_programs(2) - 1)
    def _():
        total = jnp.sum(acc_ref[...])
        out_ref[...] = jnp.broadcast_to(total, out_ref.shape)


def focal_loss(preds, masks, *, alpha=0.25, gamma=2, num_classes=9,
               tile_hw=32768, approx_reciprocal=True,
               vmem_limit_bytes=48 * 1024 * 1024):
    """preds: [B, C, H, W] float (f32 or bf16), masks: [B, H, W] int
    -> scalar focal loss (mean)."""
    if preds.shape[1] != num_classes:
        raise ValueError(
            f"Expected input tensor to have {num_classes} channels, "
            f"got {preds.shape[1]}")
    # TODO(synk): ignore_index exists in the PyTorch __init__ but is never used
    # in its forward, so it is intentionally not implemented here.

    # alpha vector (same construction as the PyTorch module __init__),
    # folded into the kernel as compile-time scalars.
    if isinstance(alpha, float):
        assert 0 <= alpha < 1, "alpha should be in [0, 1)"
        alpha_list = [float(alpha)] + [1.0 - float(alpha)] * (num_classes - 1)
    elif isinstance(alpha, (list, tuple)):
        assert len(alpha) == num_classes, "Length of alpha must match num_classes"
        alpha_list = [float(a) for a in alpha]
    else:
        alpha_list = [float(a) for a in jnp.asarray(alpha).reshape(-1)]
        assert len(alpha_list) == num_classes
    alpha_tuple = tuple(alpha_list)
    # "scalar alpha" pattern (alpha, 1-alpha, ..., 1-alpha) -> single select.
    scalar_alpha = (len(alpha_tuple) >= 2
                    and all(a == alpha_tuple[1] for a in alpha_tuple[1:]))

    B, C, H, W = preds.shape
    hw = H * W
    n_total = B * hw

    # Native NCHW layout: free reshapes, no transpose, no padding copies.
    preds3 = preds.reshape(B, C, hw)
    # Keep masks narrow to save HBM bytes (callers can pass int8 directly).
    masks3 = masks.reshape(B, 1, hw)
    if masks3.dtype not in (jnp.int8, jnp.int32):
        masks3 = masks3.astype(jnp.int32)

    # Lane-tile selection: full extent if it fits, else a multiple of 128.
    if tile_hw >= hw:
        tile = hw
        nj_total = 1
    else:
        tile = max(128, (tile_hw // 128) * 128)
        nj_total = pl.cdiv(hw, tile)

    # Extra *parallel* split of the H*W axis (helps v7x's 2 TensorCores at
    # small B; harmless on single-core v5e/v6e). Only when it divides evenly
    # so index maps stay trivially in bounds.
    n_outer = 2 if (nj_total >= 2 and nj_total % 2 == 0) else 1
    n_inner = nj_total // n_outer

    kernel = functools.partial(
        _focal_kernel, gamma=gamma, alpha_tuple=alpha_tuple,
        scalar_alpha=scalar_alpha, hw=hw, tile=tile, n_inner=n_inner,
        approx=approx_reciprocal)

    partials = pl.pallas_call(
        kernel,
        out_shape=jax.ShapeDtypeStruct((B, n_outer, 128), jnp.float32),
        grid_spec=pltpu.PrefetchScalarGridSpec(
            num_scalar_prefetch=0,
            grid=(B, n_outer, n_inner),
            in_specs=[
                pl.BlockSpec((1, C, tile),
                             lambda b, o, j: (b, 0, o * n_inner + j)),
                pl.BlockSpec((1, 1, tile),
                             lambda b, o, j: (b, 0, o * n_inner + j)),
            ],
            out_specs=pl.BlockSpec((1, 1, 128), lambda b, o, j: (b, o, 0)),
            scratch_shapes=[pltpu.VMEM((1, tile), jnp.float32)],
        ),
        compiler_params=pltpu.CompilerParams(
            dimension_semantics=("parallel", "parallel", "arbitrary"),
            vmem_limit_bytes=vmem_limit_bytes),
    )(preds3, masks3)

    return jnp.sum(partials[:, :, 0]) / jnp.float32(n_total)


def _reference_focal_loss(preds, masks, *, alpha=0.25, gamma=2, num_classes=9):
    """Pure-JAX reference for correctness checking."""
    if isinstance(alpha, float):
        alpha_vec = jnp.array([alpha] + [1.0 - alpha] * (num_classes - 1),
                              dtype=jnp.float32)
    else:
        alpha_vec = jnp.asarray(alpha, dtype=jnp.float32)
    B, C, H, W = preds.shape
    p = jnp.transpose(preds, (0, 2, 3, 1)).reshape(-1, C).astype(jnp.float32)
    m = masks.reshape(-1).astype(jnp.int32)
    logsoft = jax.nn.log_softmax(p, axis=1)
    logp = jnp.take_along_axis(logsoft, m[:, None], axis=1)[:, 0]
    prob = jnp.exp(logp)
    a = alpha_vec[m]
    loss = -a * jnp.power(1.0 - prob, gamma) * logp
    return jnp.mean(loss)


if __name__ == "__main__":
    key = jax.random.PRNGKey(0)
    k1, k2, k3, k4, k5, k6 = jax.random.split(key, 6)

    # Case 1: module-default num_classes=9, small spatial, single full tile.
    B, C, H, W = 2, 9, 16, 16
    preds = jax.random.normal(k1, (B, C, H, W), dtype=jnp.float32)
    masks = jax.random.randint(k2, (B, H, W), 0, C, dtype=jnp.int32)
    ref = _reference_focal_loss(preds, masks, alpha=0.25, gamma=2,
                                num_classes=C)
    # 1a: default fast path (approx EUP reciprocal) -> moderate tolerance.
    out = jax.block_until_ready(
        focal_loss(preds, masks, alpha=0.25, gamma=2, num_classes=C))
    assert jnp.allclose(out, ref, rtol=2e-3, atol=1e-4), (out, ref)
    # 1b: exact reciprocal -> tight tolerance.
    out_exact = jax.block_until_ready(
        focal_loss(preds, masks, alpha=0.25, gamma=2, num_classes=C,
                   approx_reciprocal=False))
    assert jnp.allclose(out_exact, ref, rtol=1e-5, atol=1e-6), (out_exact, ref)

    # Case 2: H*W not a multiple of the tile (partial-tile masking path) and
    # a per-class alpha list (vector-alpha fold path).
    B2, H2, W2 = 2, 16, 20
    alpha_list = [0.1, 0.9, 0.8, 0.7, 0.6, 0.5, 0.4, 0.3, 0.2]
    preds2 = jax.random.normal(k3, (B2, C, H2, W2), dtype=jnp.float32)
    masks2 = jax.random.randint(k4, (B2, H2, W2), 0, C, dtype=jnp.int32)
    out2 = jax.block_until_ready(
        focal_loss(preds2, masks2, alpha=alpha_list, gamma=2, num_classes=C,
                   tile_hw=128, approx_reciprocal=False))
    ref2 = _reference_focal_loss(preds2, masks2, alpha=alpha_list, gamma=2,
                                 num_classes=C)
    assert jnp.allclose(out2, ref2, rtol=1e-5, atol=1e-6), (out2, ref2)

    # Case 3: outer parallel HW split (n_outer=2), bf16 preds, int8 masks.
    B3, H3, W3 = 1, 16, 32
    preds3 = jax.random.normal(k5, (B3, C, H3, W3), dtype=jnp.float32
                               ).astype(jnp.bfloat16)
    masks3 = jax.random.randint(k6, (B3, H3, W3), 0, C,
                                dtype=jnp.int32).astype(jnp.int8)
    out3 = jax.block_until_ready(
        focal_loss(preds3, masks3, alpha=0.25, gamma=2, num_classes=C,
                   tile_hw=128, approx_reciprocal=False))
    ref3 = _reference_focal_loss(preds3, masks3, alpha=0.25, gamma=2,
                                 num_classes=C)
    assert jnp.allclose(out3, ref3, rtol=1e-5, atol=1e-6), (out3, ref3)

    print("KERNEL_OK")
</pallas_src>

<mosaic_0001>
module attributes {stable_mosaic.version = 11 : i64} {
  func.func @_focal_kernel(%arg0: i32, %arg1: i32, %arg2: i32, %arg3: memref<1x9x256xf32, #tpu.memory_space<vmem>>, %arg4: memref<1x1x256xi32, #tpu.memory_space<vmem>>, %arg5: memref<1x1x128xf32, #tpu.memory_space<vmem>>, %arg6: memref<1x256xf32, #tpu.memory_space<vmem>>) attributes {dimension_semantics = [#tpu.dimension_semantics<parallel>, #tpu.dimension_semantics<parallel>, #tpu.dimension_semantics<arbitrary>], iteration_bounds = array<i64: 2, 1, 1>, scalar_prefetch = 0 : i64, scratch_operands = 1 : i64, tpu.core_type = #tpu.core_type<tc>, window_params = [{transform_indices = @transform_0, window_bounds = array<i64: 1, 9, 256>}, {transform_indices = @transform_1, window_bounds = array<i64: 1, 1, 256>}, {transform_indices = @transform_2, window_bounds = array<i64: 1, 1, 128>}]} {
    %c0_i32 = arith.constant 0 : i32
    %0 = arith.cmpi eq, %arg2, %c0_i32 : i32
    %1 = arith.extui %0 : i1 to i32
    %c0_i32_0 = arith.constant 0 : i32
    %2 = arith.cmpi ne, %1, %c0_i32_0 : i32
    scf.if %2 {
      %cst_24 = arith.constant 0.000000e+00 : f32
      %58 = vector.broadcast %cst_24 : f32 to vector<1x256xf32>
      %c0_25 = arith.constant 0 : index
      %c0_26 = arith.constant 0 : index
      %59 = vector.load %arg6[%c0_25, %c0_26] : memref<1x256xf32, #tpu.memory_space<vmem>>, vector<1x256xf32>
      tpu.vector_store %arg6[%c0_25, %c0_26], %58 {strides = array<i32>} : memref<1x256xf32, #tpu.memory_space<vmem>>, vector<1x256xf32>,
    } else {
    }
    %c0 = arith.constant 0 : index
    %c0_1 = arith.constant 0 : index
    %c0_2 = arith.constant 0 : index
    %3 = vector.load %arg3[%c0, %c0_1, %c0_2] : memref<1x9x256xf32, #tpu.memory_space<vmem>>, vector<1x9x256xf32>
    %4 = vector.shape_cast %3 : vector<1x9x256xf32> to vector<9x256xf32>
    %c0_3 = arith.constant 0 : index
    %c0_4 = arith.constant 0 : index
    %c0_5 = arith.constant 0 : index
    %5 = vector.load %arg4[%c0_3, %c0_4, %c0_5] : memref<1x1x256xi32, #tpu.memory_space<vmem>>, vector<1x1x256xi32>
    %6 = vector.shape_cast %5 : vector<1x1x256xi32> to vector<1x256xi32>
    %7 = tpu.iota {dimensions = array<i32: 0>} : vector<9x256xi32>
    %8 = vector.broadcast %6 : vector<1x256xi32> to vector<9x256xi32>
    %9 = arith.cmpi eq, %7, %8 : vector<9x256xi32>
    %cst = arith.constant dense<0xFF800000> : vector<256xf32>
    %10 = vector.multi_reduction <maximumf>, %4, %cst [0] : vector<9x256xf32> to vector<256xf32>
    %11 = vector.shape_cast %10 : vector<256xf32> to vector<1x256xf32>
    %12 = vector.broadcast %11 : vector<1x256xf32> to vector<9x256xf32>
    %13 = arith.subf %4, %12 : vector<9x256xf32>
    %14 = math.exp %13 : vector<9x256xf32>
    %cst_6 = arith.constant dense<0.000000e+00> : vector<256xf32>
    %15 = vector.multi_reduction <add>, %14, %cst_6 [0] : vector<9x256xf32> to vector<256xf32>
    %16 = vector.shape_cast %15 : vector<256xf32> to vector<1x256xf32>
    %17 = math.log %16 : vector<1x256xf32>
    %18 = arith.addf %11, %17 : vector<1x256xf32>
    %cst_7 = arith.constant 0.000000e+00 : f32
    %19 = vector.broadcast %cst_7 : f32 to vector<9x256xf32>
    %20 = arith.select %9, %4, %19 : vector<9x256xi1>, vector<9x256xf32>
    %cst_8 = arith.constant dense<0.000000e+00> : vector<256xf32>
    %21 = vector.multi_reduction <add>, %20, %cst_8 [0] : vector<9x256xf32> to vector<256xf32>
    %22 = vector.shape_cast %21 : vector<256xf32> to vector<1x256xf32>
    %cst_9 = arith.constant 0.000000e+00 : f32
    %23 = vector.broadcast %cst_9 : f32 to vector<9x256xf32>
    %24 = arith.select %9, %14, %23 : vector<9x256xi1>, vector<9x256xf32>
    %cst_10 = arith.constant dense<0.000000e+00> : vector<256xf32>
    %25 = vector.multi_reduction <add>, %24, %cst_10 [0] : vector<9x256xf32> to vector<256xf32>
    %26 = vector.shape_cast %25 : vector<256xf32> to vector<1x256xf32>
    %27 = arith.subf %22, %18 : vector<1x256xf32>
    %28 = tpu.reciprocal %16 {approx = true} : vector<1x256xf32> -> vector<1x256xf32>
    %29 = arith.mulf %26, %28 : vector<1x256xf32>
    %c0_i32_11 = arith.constant 0 : i32
    %30 = vector.broadcast %c0_i32_11 : i32 to vector<1x256xi32>
    %31 = arith.cmpi eq, %6, %30 : vector<1x256xi32>
    %cst_12 = arith.constant 2.500000e-01 : f32
    %cst_13 = arith.constant 7.500000e-01 : f32
    %32 = vector.broadcast %cst_12 : f32 to vector<1x256xf32>
    %33 = vector.broadcast %cst_13 : f32 to vector<1x256xf32>
    %34 = arith.select %31, %32, %33 : vector<1x256xi1>, vector<1x256xf32>
    %cst_14 = arith.constant 1.000000e+00 : f32
    %35 = vector.broadcast %cst_14 : f32 to vector<1x256xf32>
    %36 = arith.subf %35, %29 : vector<1x256xf32>
    %37 = arith.mulf %36, %36 : vector<1x256xf32>
    %cst_15 = arith.constant 0.000000e+00 : f32
    %38 = vector.broadcast %cst_15 : f32 to vector<1x256xf32>
    %39 = arith.subf %38, %34 : vector<1x256xf32>
    %40 = arith.mulf %39, %37 : vector<1x256xf32>
    %41 = arith.mulf %40, %27 : vector<1x256xf32>
    %42 = tpu.iota {dimensions = array<i32: 1>} : vector<1x256xi32>
    %c1_i32 = arith.constant 1 : i32
    %43 = arith.muli %arg1, %c1_i32 : i32
    %44 = arith.addi %43, %arg2 : i32
    %c256_i32 = arith.constant 256 : i32
    %45 = arith.muli %44, %c256_i32 : i32
    %46 = vector.broadcast %45 : i32 to vector<1x256xi32>
    %47 = arith.addi %42, %46 : vector<1x256xi32>
    %c256_i32_16 = arith.constant 256 : i32
    %48 = vector.broadcast %c256_i32_16 : i32 to vector<1x256xi32>
    %49 = arith.cmpi slt, %47, %48 : vector<1x256xi32>
    %cst_17 = arith.constant 0.000000e+00 : f32
    %50 = vector.broadcast %cst_17 : f32 to vector<1x256xf32>
    %51 = arith.select %49, %41, %50 : vector<1x256xi1>, vector<1x256xf32>
    %c0_18 = arith.constant 0 : index
    %c0_19 = arith.constant 0 : index
    %52 = vector.load %arg6[%c0_18, %c0_19] : memref<1x256xf32, #tpu.memory_space<vmem>>, vector<1x256xf32>
    %53 = arith.addf %52, %51 : vector<1x256xf32>
    %c0_20 = arith.constant 0 : index
    %c0_21 = arith.constant 0 : index
    %54 = vector.load %arg6[%c0_20, %c0_21] : memref<1x256xf32, #tpu.memory_space<vmem>>, vector<1x256xf32>
    tpu.vector_store %arg6[%c0_20, %c0_21], %53 {strides = array<i32>} : memref<1x256xf32, #tpu.memory_space<vmem>>, vector<1x256xf32>,
    %c0_i32_22 = arith.constant 0 : i32
    %55 = arith.cmpi eq, %arg2, %c0_i32_22 : i32
    %56 = arith.extui %55 : i1 to i32
    %c0_i32_23 = arith.constant 0 : i32
    %57 = arith.cmpi ne, %56, %c0_i32_23 : i32
    scf.if %57 {
      %c0_24 = arith.constant 0 : index
      %c0_25 = arith.constant 0 : index
      %58 = vector.load %arg6[%c0_24, %c0_25] : memref<1x256xf32, #tpu.memory_space<vmem>>, vector<1x256xf32>
      %59 = vector.shape_cast %58 : vector<1x256xf32> to vector<1x1x256xf32>
      %cst_26 = arith.constant dense<0.000000e+00> : vector<1xf32>
      %60 = vector.multi_reduction <add>, %59, %cst_26 [1, 2] : vector<1x1x256xf32> to vector<1xf32>
      %61 = vector.shape_cast %60 : vector<1xf32> to vector<1x1x1xf32>
      %62 = vector.extract %61[0, 0, 0] : f32 from vector<1x1x1xf32>
      %63 = vector.broadcast %62 : f32 to vector<1x1x128xf32>
      %c0_27 = arith.constant 0 : index
      %c0_28 = arith.constant 0 : index
      %c0_29 = arith.constant 0 : index
      %64 = vector.load %arg5[%c0_27, %c0_28, %c0_29] : memref<1x1x128xf32, #tpu.memory_space<vmem>>, vector<1x1x128xf32>
      tpu.vector_store %arg5[%c0_27, %c0_28, %c0_29], %63 {strides = array<i32>} : memref<1x1x128xf32, #tpu.memory_space<vmem>>, vector<1x1x128xf32>,
    } else {
    }
    return
  }
  func.func @transform_0(%arg0: i32, %arg1: i32, %arg2: i32) -> (i32, i32, i32) {
    %c1_i32 = arith.constant 1 : i32
    %0 = arith.muli %arg1, %c1_i32 : i32
    %1 = arith.addi %0, %arg2 : i32
    %c0_i32 = arith.constant 0 : i32
    %c0_i32_0 = arith.constant 0 : i32
    return %arg0, %c0_i32, %1 : i32, i32, i32
  }
  func.func @transform_1(%arg0: i32, %arg1: i32, %arg2: i32) -> (i32, i32, i32) {
    %c1_i32 = arith.constant 1 : i32
    %0 = arith.muli %arg1, %c1_i32 : i32
    %1 = arith.addi %0, %arg2 : i32
    %c0_i32 = arith.constant 0 : i32
    %c0_i32_0 = arith.constant 0 : i32
    return %arg0, %c0_i32, %1 : i32, i32, i32
  }
  func.func @transform_2(%arg0: i32, %arg1: i32, %arg2: i32) -> (i32, i32, i32) {
    %c0_i32 = arith.constant 0 : i32
    %c0_i32_0 = arith.constant 0 : i32
    return %arg0, %arg1, %c0_i32 : i32, i32, i32
  }
}

</mosaic_0001>

<llo_original>
// kernel: tpu_custom_call.1
$region0: #{tpu_custom_call.1}
  #allocation0 [shape = 'u32[]', space=smem, size = 0x4, offset = 0x4, fixed_abs, tag = 'smem constant byte address 0x4 - core index']
  #allocation1 [shape = 'u32[144,128]{1,0:T(1,128)}', space=vmem, size = 0x12000, scoped, tag = 'internal scratch']
  #allocation2 [shape = 'f32[1,256]{1,0:T(1,128)}', space=vmem, size = 0x400, scoped, tag = 'scratch operand']
  %s0 = inlined_call_operand.vmem [shape: f32[2,9,256], index: 0, kind: input, shape index: {}]
  %s1 = inlined_call_operand.vmem [shape: s32[2,1,256], index: 1, kind: input, shape index: {}]
  %s2 = inlined_call_operand.hbm [shape: f32[2,1,128], index: 2, kind: output, shape index: {}]
  %s3 = sld [smem:[#allocation0]]
  $region49: #{tpu_custom_call.1} parent=0
    _
  %s5 = ssub.s32 1, %s3
  %s6 = scalar_select 0, %s5, %s3
  $region1: #{tpu_custom_call.1} parent=0
    #allocation3 [shape = 'u8[1024]{0}', space=vmem, size = 0x400, scoped, tag = 'output window, operand 0']
    #allocation4 [shape = 's32[2]{0}', space=sflag, size = 0x8, scoped, tag = 'scoped memory for tpu_custom_call.1']
    %7 = vsyncpa [#allocation4], 0
    %s8 = scalar_lea.sflag [#allocation4], 1
    %9 = vsyncpa %s8, 0
    loop: start=0, step=1, limit=4
    $region2: #{tpu_custom_call.1} parent=1 // loop_pre_header
      _
    $region3: #{tpu_custom_call.1} parent=1 // loop_header
      %s11 = sphi 0, %s15
      %p12 = scmp.ge.s32.totalorder %s11, 4
      %s18 = sphi 0, %s37
      %s19 = sphi 0, %s33
      %s20 = sphi 0, %s29
      %s21 = sphi 0, %s18
      %s22 = sphi 0, %s19
      %s23 = sphi 0, %s20
      %s24 = sphi 0, %s21
      %s25 = sphi 0, %s22
      %s26 = sphi 0, %s23
      %s44 = sphi 0, %s46
      %s47 = sphi 0, %s44
      %s48 = sphi 0, %s47
      %s64 = sphi 0, %s48
      %s74 = sphi 0, %s76
      %s77 = sphi 0, %s74
      %s78 = sphi 0, %s77
      %s94 = sphi 0, %s78
      %s102 = sphi 0, %s104
      %s105 = sphi 0, %s102
      %s106 = sphi 0, %s105
      %s122 = sphi 0, %s106
    $region4: #{tpu_custom_call.1} parent=1 // loop_header_branch
      %14 = sbr.rel (%p12) target = $region8
    $region5: #{tpu_custom_call.1} parent=1 // loop_body
      %s16 = ssub.s32 %s11, 1
      %s17 = ssub.s32 %s11, 2
      %s27 = sadd.s32 1, %s20
      %p28 = scmp.ge.s32.totalorder %s27, 1
      %s29 = scalar_select %p28, 0, %s27
      %s30 = sadd.s32 1, %s19
      %s31 = scalar_select %p28, %s30, %s19
      %p32 = scmp.ge.s32.totalorder %s31, 1
      %s33 = scalar_select %p32, 0, %s31
      %s34 = sadd.s32 1, %s18
      %s35 = scalar_select %p32, %s34, %s18
      %p36 = scmp.ge.s32.totalorder %s35, 2
      %s37 = scalar_select %p36, 0, %s35
      %s38 = sadd.s32 %s19, %s20
      %s39 = sadd.s32 %s33, %s29
      %s40 = ssub.s32 %s18, %s37
      %s41 = ssub.s32 %s38, %s39
      %s42 = sor.u32 %s40, %s41
      %p43 = scmp.eq.s32.totalorder %s42, 0
      %s45 = sadd.s32 %s44, 1
      %s46 = scalar_select %p43, %s44, %s45
      %p49 = pneg %p43
      %p50 = scmp.eq.s32.totalorder %s11, 1
      %p51 = por %p49, %p50
      %p52 = scmp.ne.s32.totalorder %s44, %s47
      %p53 = scmp.eq.s32.totalorder %s11, 0
      %p54 = por %p52, %p53
      %p55 = scmp.ne.s32.totalorder %s44, %s47
      %p56 = scmp.eq.s32.totalorder %s16, 1
      %p57 = por %p55, %p56
      %p58 = scmp.ne.s32.totalorder %s47, %s48
      %p59 = scmp.eq.s32.totalorder %s16, 0
      %p60 = por %p58, %p59
      %p61 = scmp.ne.s32.totalorder %s47, %s48
      %p62 = scmp.eq.s32.totalorder %s17, 1
      %p63 = por %p61, %p62
      %p65 = scmp.ne.s32.totalorder %s48, %s64
      %p66 = scmp.eq.s32.totalorder %s17, 0
      %p67 = por %p65, %p66
      %s68 = sadd.s32 %s19, %s20
      %s69 = sadd.s32 %s33, %s29
      %s70 = ssub.s32 %s18, %s37
      %s71 = ssub.s32 %s68, %s69
      %s72 = sor.u32 %s70, %s71
      %p73 = scmp.eq.s32.totalorder %s72, 0
      %s75 = sadd.s32 %s74, 1
      %s76 = scalar_select %p73, %s74, %s75
      %p79 = pneg %p73
      %p80 = scmp.eq.s32.totalorder %s11, 1
      %p81 = por %p79, %p80
      %p82 = scmp.ne.s32.totalorder %s74, %s77
      %p83 = scmp.eq.s32.totalorder %s11, 0
      %p84 = por %p82, %p83
      %p85 = scmp.ne.s32.totalorder %s74, %s77
      %p86 = scmp.eq.s32.totalorder %s16, 1
      %p87 = por %p85, %p86
      %p88 = scmp.ne.s32.totalorder %s77, %s78
      %p89 = scmp.eq.s32.totalorder %s16, 0
      %p90 = por %p88, %p89
      %p91 = scmp.ne.s32.totalorder %s77, %s78
      %p92 = scmp.eq.s32.totalorder %s17, 1
      %p93 = por %p91, %p92
      %p95 = scmp.ne.s32.totalorder %s78, %s94
      %p96 = scmp.eq.s32.totalorder %s17, 0
      %p97 = por %p95, %p96
      %s98 = ssub.s32 %s18, %s37
      %s99 = ssub.s32 %s19, %s33
      %s100 = sor.u32 %s98, %s99
      %p101 = scmp.eq.s32.totalorder %s100, 0
      %s103 = sadd.s32 %s102, 1
      %s104 = scalar_select %p101, %s102, %s103
      %p107 = pneg %p101
      %p108 = scmp.eq.s32.totalorder %s11, 1
      %p109 = por %p107, %p108
      %p110 = scmp.ne.s32.totalorder %s102, %s105
      %p111 = scmp.eq.s32.totalorder %s11, 0
      %p112 = por %p110, %p111
      %p113 = scmp.ne.s32.totalorder %s102, %s105
      %p114 = scmp.eq.s32.totalorder %s16, 1
      %p115 = por %p113, %p114
      %p116 = scmp.ne.s32.totalorder %s105, %s106
      %p117 = scmp.eq.s32.totalorder %s16, 0
      %p118 = por %p116, %p117
      %p119 = scmp.ne.s32.totalorder %s105, %s106
      %p120 = scmp.eq.s32.totalorder %s17, 1
      %p121 = por %p119, %p120
      %p123 = scmp.ne.s32.totalorder %s106, %s122
      %p124 = scmp.eq.s32.totalorder %s17, 0
      %p125 = por %p123, %p124
      %p126 = scmp.le.s32.totalorder 1, %s11
      %p127 = scmp.lt.s32.totalorder %s11, 3
      %p128 = pnand %p126, %p127
      %p129 = pneg %p128
      // Predicated region
      $region9: #{tpu_custom_call.1} parent=5 // pred_check
        _
      $region10: #{tpu_custom_call.1} parent=5 // pred_check_branch
        %131 = sbr.rel (%p128) target = $region12
      $region11: #{tpu_custom_call.1} parent=5 // pred_region
        %s132 = ssub.s32 %s11, 1
      $region12: #{tpu_custom_call.1} parent=5 // pred_fallthru
        _
      %p133 = scmp.lt.s32.totalorder %s11, 2
      // Predicated region
      $region13: #{tpu_custom_call.1} parent=5 // pred_check
        %p134 = pneg %p133
      $region14: #{tpu_custom_call.1} parent=5 // pred_check_branch
        %136 = sbr.rel (%p134) target = $region16
      $region15: #{tpu_custom_call.1} parent=5 // pred_region
        // Predicated region
        $region17: #{tpu_custom_call.1} parent=15 // pred_check
          %p137 = pneg %p54
        $region18: #{tpu_custom_call.1} parent=15 // pred_check_branch
          %139 = sbr.rel (%p137) target = $region20
        $region19: #{tpu_custom_call.1} parent=15 // pred_region
          %s140 = sadd.s32 %s19, %s20
          %s141 = smul.u32 2, %s140
          %p142 = scmp.lt.s32.totalorder %s18, 1
          %s143 = scalar_select %p142, %s18, 1
          %p144 = scmp.lt.s32.totalorder %s141, 1
          %s145 = scalar_select %p144, %s141, 1
          %s146 = smul.addr %s143, 4
          %s147 = sadd.s32 %s145, %s146
          %s148 = smul.addr %s147, 8
          %s149 = scalar_lea.vmem %s0, %s148
          %s150 = sadd.s32 %s19, %s20
          %s151 = smul.u32 2, %s150
        $region20: #{tpu_custom_call.1} parent=15 // pred_fallthru
          _
        // Predicated region
        $region21: #{tpu_custom_call.1} parent=15 // pred_check
          %p152 = pneg %p84
        $region22: #{tpu_custom_call.1} parent=15 // pred_check_branch
          %154 = sbr.rel (%p152) target = $region24
        $region23: #{tpu_custom_call.1} parent=15 // pred_region
          %s155 = sadd.s32 %s19, %s20
          %s156 = smul.u32 2, %s155
          %p157 = scmp.lt.s32.totalorder %s18, 1
          %s158 = scalar_select %p157, %s18, 1
          %p159 = scmp.lt.s32.totalorder %s156, 1
          %s160 = scalar_select %p159, %s156, 1
          %s161 = smul.addr %s158, 2
          %s162 = sadd.s32 %s160, %s161
          %s163 = scalar_lea.vmem %s1, %s162
          %s164 = sadd.s32 %s19, %s20
          %s165 = smul.u32 2, %s164
        $region24: #{tpu_custom_call.1} parent=15 // pred_fallthru
          _
      $region16: #{tpu_custom_call.1} parent=5 // pred_fallthru
        _
      %p166 = scmp.le.s32.totalorder 1, %s11
      %p167 = scmp.lt.s32.totalorder %s11, 3
      %p168 = pnand %p166, %p167
      %p169 = pneg %p168
      // Predicated region
      $region25: #{tpu_custom_call.1} parent=5 // pred_check
        _
      $region26: #{tpu_custom_call.1} parent=5 // pred_check_branch
        %171 = sbr.rel (%p168) target = $region28
      $region27: #{tpu_custom_call.1} parent=5 // pred_region
        %s172 = ssub.s32 %s11, 1
        %s173 = sadd.s32 %s22, %s23
        %s174 = smul.u32 2, %s173
        %p175 = scmp.lt.s32.totalorder %s21, 1
        %s176 = scalar_select %p175, %s21, 1
        %p177 = scmp.lt.s32.totalorder %s174, 1
        %s178 = scalar_select %p177, %s174, 1
        %s179 = smul.addr %s176, 4
        %s180 = sadd.s32 %s178, %s179
        %s181 = smul.addr %s180, 8
        %s182 = scalar_lea.vmem %s0, %s181
        %p183 = pneg %p60
        %p184 = pneg %p57
        %s185 = sadd.s32 %s22, %s23
        %s186 = smul.u32 2, %s185
        %p187 = scmp.lt.s32.totalorder %s21, 1
        %s188 = scalar_select %p187, %s21, 1
        %p189 = scmp.lt.s32.totalorder %s186, 1
        %s190 = scalar_select %p189, %s186, 1
        %s191 = smul.addr %s188, 2
        %s192 = sadd.s32 %s190, %s191
        %s193 = scalar_lea.vmem %s1, %s192
        %p194 = pneg %p90
        %p195 = pneg %p87
        %p196 = pneg %p118
        %p197 = pneg %p115
        %s198 = sand.u32 %s105, 1
        %s199 = scalar_lea.sflag [#allocation4], %s198
        %s200 = sand.u32 %s105, 1
        %s201 = scalar_lea.vmem [#allocation3], %s200
        %s202 = sadd.s32 %s22, %s23
        %s203 = smul.u32 2, %s202
        %p204 = scmp.lt.s32.totalorder %s21, 1
        %s205 = scalar_select %p204, %s21, 1
        %p206 = scmp.lt.s32.totalorder %s203, 1
        %s207 = scalar_select %p206, %s203, 1
        %s208 = smul.addr %s205, 4
        %s209 = sadd.s32 %s207, %s208
        %s210 = smul.addr %s209, 8
        %s211 = scalar_lea.vmem %s0, %s210
        %s212 = sadd.s32 %s22, %s23
        %s213 = smul.u32 2, %s212
        %s214 = sadd.s32 %s22, %s23
        %s215 = smul.u32 2, %s214
        %p216 = scmp.lt.s32.totalorder %s21, 1
        %s217 = scalar_select %p216, %s21, 1
        %p218 = scmp.lt.s32.totalorder %s215, 1
        %s219 = scalar_select %p218, %s215, 1
        %s220 = smul.addr %s217, 2
        %s221 = sadd.s32 %s219, %s220
        %s222 = scalar_lea.vmem %s1, %s221
        %s223 = sadd.s32 %s22, %s23
        %s224 = smul.u32 2, %s223
        %p225 = scmp.eq.s32.totalorder %s23, 0
        // Predicated region
        $region29: #{tpu_custom_call.1} parent=27 // pred_check
          %p226 = pneg %p225
        $region30: #{tpu_custom_call.1} parent=27 // pred_check_branch
          %228 = sbr.rel (%p226) target = $region32
        $region31: #{tpu_custom_call.1} parent=27 // pred_region
          %v229 = vlaneseq
          %vm230 = vcmp.ge.s32.totalorder %v229, 0
          %vm231 = vcmp.lt.s32.totalorder %v229, 256
          %vm232 = vmand %vm230, %vm231
          %233 = vst.msk [vmem:[#allocation2] sm:$0x3] %vm232, 0.0
        $region32: #{tpu_custom_call.1} parent=27 // pred_fallthru
          _
        %v234 = vld [vmem:[%s211] sm:$0xff]
        %v235 = vld [vmem:[%s211 + $0x8] sm:$0xff]
        %v236 = vld [vmem:[%s211 + $0x10] sm:$0x1]
        %v237 = vld [vmem:[%s211 + $0x18] sm:$0x1]
        %v238 = vld [vmem:[%s222] sm:$0x3]
        %v239 = vlaneseq
        %v240 = vshrl.u32 %v239, 7
        %v241 = vadd.s32 %v240, 8
        %v242 = vlaneseq
        %v243 = vshrl.u32 %v242, 7
        %v244 = vsub.s32 0, %v243
        %v245 = vrot.slane %v238, %v244
        %v246 = vlaneseq
        %v247 = vshrl.u32 %v246, 7
        %v248 = vsub.s32 1, %v247
        %v249 = vrot.slane %v238, %v248
        %vm250 = vcmp.eq.s32.totalorder %v240, %v245
        %vm251 = vcmp.eq.s32.totalorder %v240, %v249
        %vm252 = vcmp.eq.s32.totalorder %v241, %v245
        %vm253 = vcmp.eq.s32.totalorder %v241, %v249
        %vm254 = vcmask 1040384
        %v255 = vsel %vm254, %v236, -inf
        %v256 = vmax.f32 %v234, %v255
        %v257 = vrot.slane %v256, 4
        %v258 = vmax.f32 %v256, %v257
        %v259 = vrot.slane %v258, 2
        %v260 = vmax.f32 %v258, %v259
        %v261 = vrot.slane %v260, 1
        %v262 = vmax.f32 %v260, %v261
        %v263 = vsel %vm254, %v237, -inf
        %v264 = vmax.f32 %v235, %v263
        %v265 = vrot.slane %v264, 4
        %v266 = vmax.f32 %v264, %v265
        %v267 = vrot.slane %v266, 2
        %v268 = vmax.f32 %v266, %v267
        %v269 = vrot.slane %v268, 1
        %v270 = vmax.f32 %v268, %v269
        %v271 = vsub.f32 %v234, %v262
        %v272 = vsub.f32 %v235, %v270
        %v273 = vsub.f32 %v236, %v262
        %v274 = vsub.f32 %v237, %v270
        %v275 = vmul.f32 %v271, 1.442695
        %v276 = vpow.pop %v275
        %v277 = vmul.f32 %v272, 1.442695
        %v278 = vpow.pop %v277
        %v279 = vmul.f32 %v273, 1.442695
        %v280 = vpow.pop %v279
        %v281 = vmul.f32 %v274, 1.442695
        %v282 = vpow.pop %v281
        %v283 = vsel %vm254, %v280, 0.0
        %v284 = vadd.f32 %v276, %v283
        %v285 = vrot.slane %v284, 4
        %v286 = vadd.f32 %v284, %v285
        %v287 = vrot.slane %v286, 2
        %v288 = vadd.f32 %v286, %v287
        %v289 = vrot.slane %v288, 1
        %v290 = vadd.f32 %v288, %v289
        %v291 = vsel %vm254, %v282, 0.0
        %v292 = vadd.f32 %v278, %v291
        %v293 = vrot.slane %v292, 4
        %v294 = vadd.f32 %v292, %v293
        %v295 = vrot.slane %v294, 2
        %v296 = vadd.f32 %v294, %v295
        %v297 = vrot.slane %v296, 1
        %v298 = vadd.f32 %v296, %v297
        %v299 = vlog2.pop %v290
        %v300 = vmul.f32 %v299, 0.6931472
        %v301 = vlog2.pop %v298
        %v302 = vmul.f32 %v301, 0.6931472
        %v303 = vadd.f32 %v262, %v300
        %v304 = vadd.f32 %v270, %v302
        %v305 = vsel %vm250, %v234, 0.0
        %v306 = vsel %vm251, %v235, 0.0
        %v307 = vsel %vm252, %v236, 0.0
        %v308 = vsel %vm253, %v237, 0.0
        %v309 = vsel %vm254, %v307, 0.0
        %v310 = vadd.f32 %v305, %v309
        %v311 = vrot.slane %v310, 4
        %v312 = vadd.f32 %v310, %v311
        %v313 = vrot.slane %v312, 2
        %v314 = vadd.f32 %v312, %v313
        %v315 = vrot.slane %v314, 1
        %v316 = vadd.f32 %v314, %v315
        %v317 = vsel %vm254, %v308, 0.0
        %v318 = vadd.f32 %v306, %v317
        %v319 = vrot.slane %v318, 4
        %v320 = vadd.f32 %v318, %v319
        %v321 = vrot.slane %v320, 2
        %v322 = vadd.f32 %v320, %v321
        %v323 = vrot.slane %v322, 1
        %v324 = vadd.f32 %v322, %v323
        %v325 = vsel %vm250, %v276, 0.0
        %v326 = vsel %vm251, %v278, 0.0
        %v327 = vsel %vm252, %v280, 0.0
        %v328 = vsel %vm253, %v282, 0.0
        %v329 = vsel %vm254, %v327, 0.0
        %v330 = vadd.f32 %v325, %v329
        %v331 = vrot.slane %v330, 4
        %v332 = vadd.f32 %v330, %v331
        %v333 = vrot.slane %v332, 2
        %v334 = vadd.f32 %v332, %v333
        %v335 = vrot.slane %v334, 1
        %v336 = vadd.f32 %v334, %v335
        %v337 = vsel %vm254, %v328, 0.0
        %v338 = vadd.f32 %v326, %v337
        %v339 = vrot.slane %v338, 4
        %v340 = vadd.f32 %v338, %v339
        %v341 = vrot.slane %v340, 2
        %v342 = vadd.f32 %v340, %v341
        %v343 = vrot.slane %v342, 1
        %v344 = vadd.f32 %v342, %v343
        %v345 = vsub.f32 %v316, %v303
        %v346 = vsub.f32 %v324, %v304
        %v347 = vrcp.pop %v290
        %v348 = vrcp.pop %v298
        %v349 = vmul.f32 %v336, %v347
        %v350 = vmul.f32 %v344, %v348
        %vm351 = vcmp.eq.s32.totalorder %v238, 0
        %v352 = vsel %vm351, 0.25, 0.75
        %v353 = vsub.f32 1.0, %v349
        %v354 = vsub.f32 1.0, %v350
        %v355 = vmul.f32 %v353, %v353
        %v356 = vmul.f32 %v354, %v354
        %v357 = vsub.f32 0.0, %v352
        %v360 = vcombine.low %v355, %v356
        %v362 = vunpack.c.l.s4 1966171168
        %v363 = vunpack.c.0.s8 %v362
        %v364 = vlaneseq
        %v365 = vshrl.u32 %v364, 7
        %v366 = vsub.s32 %v363, %v365
        %v367 = vrot.slane %v360, %v366
        %v369 = vunpack.c.l.s4 1966171168
        %v370 = vunpack.c.0.s8 %v369
        %v371 = vlaneseq
        %v372 = vshrl.u32 %v371, 7
        %v373 = vsub.s32 %v370, %v372
        %v374 = vrot.slane %v367, %v373
        %v376 = vmul.f32 %v357, %v374
        %v379 = vcombine.low %v345, %v346
        %v381 = vunpack.c.l.s4 1966171168
        %v382 = vunpack.c.0.s8 %v381
        %v383 = vlaneseq
        %v384 = vshrl.u32 %v383, 7
        %v385 = vsub.s32 %v382, %v384
        %v386 = vrot.slane %v379, %v385
        %v388 = vunpack.c.l.s4 1966171168
        %v389 = vunpack.c.0.s8 %v388
        %v390 = vlaneseq
        %v391 = vshrl.u32 %v390, 7
        %v392 = vsub.s32 %v389, %v391
        %v393 = vrot.slane %v386, %v392
        %v395 = vmul.f32 %v376, %v393
        %v396 = vlaneseq
        %v397 = vand.u32 %v396, 127
        %v398 = vadd.s32 %v397, 128
        %s399 = sadd.s32 %s22, %s23
        %s400 = smul.u32 %s399, 256
        %v401 = vstv %s400
        %v402 = vadd.s32 %v397, %v401
        %v403 = vadd.s32 %v398, %v401
        %vm404 = vcmp.lt.s32.totalorder %v402, 256
        %vm405 = vcmp.lt.s32.totalorder %v403, 256
        %v407 = vlaneseq
        %v408 = vshrl.u32 %v407, 7
        %v409 = vsub.s32 0, %v408
        %v410 = vrot.slane %v395, %v409
        %v411 = vlaneseq
        %v412 = vshrl.u32 %v411, 7
        %v413 = vsub.s32 1, %v412
        %v414 = vrot.slane %v395, %v413
        %v417 = vsel %vm404, %v410, 0.0
        %v418 = vsel %vm405, %v414, 0.0
        %v419 = vld [vmem:[#allocation2] sm:$0x3]
        %v422 = vcombine.low %v417, %v418
        %v424 = vunpack.c.l.s4 1966171168
        %v425 = vunpack.c.0.s8 %v424
        %v426 = vlaneseq
        %v427 = vshrl.u32 %v426, 7
        %v428 = vsub.s32 %v425, %v427
        %v429 = vrot.slane %v422, %v428
        %v431 = vunpack.c.l.s4 1966171168
        %v432 = vunpack.c.0.s8 %v431
        %v433 = vlaneseq
        %v434 = vshrl.u32 %v433, 7
        %v435 = vsub.s32 %v432, %v434
        %v436 = vrot.slane %v429, %v435
        %v438 = vadd.f32 %v419, %v436
        %v439 = vlaneseq
        %vm440 = vcmp.ge.s32.totalorder %v439, 0
        %vm441 = vcmp.lt.s32.totalorder %v439, 256
        %vm442 = vmand %vm440, %vm441
        %443 = vst.msk [vmem:[#allocation2] sm:$0x3] %vm442, %v438
        // Predicated region
        $region33: #{tpu_custom_call.1} parent=27 // pred_check
          %p444 = pneg %p225
        $region34: #{tpu_custom_call.1} parent=27 // pred_check_branch
          %446 = sbr.rel (%p444) target = $region36
        $region35: #{tpu_custom_call.1} parent=27 // pred_region
          %v447 = vld [vmem:[#allocation2] sm:$0x3]
          %v449 = vlaneseq
          %v450 = vshrl.u32 %v449, 7
          %v451 = vsub.s32 0, %v450
          %v452 = vrot.slane %v447, %v451
          %v453 = vlaneseq
          %v454 = vshrl.u32 %v453, 7
          %v455 = vsub.s32 1, %v454
          %v456 = vrot.slane %v447, %v455
          %v459 = vsel %vm254, %v452, 0.0
          %v460 = vsel %vm254, %v456, 0.0
          %v461 = vadd.f32 %v459, %v460
          %462 = vadd.xlane.f32.xlu0 %v461
          %v463 = vpop.xlane.xlu0 %462
          %v464 = vrot.slane %v463, 4
          %v465 = vadd.f32 %v463, %v464
          %v466 = vrot.slane %v465, 2
          %v467 = vadd.f32 %v465, %v466
          %v468 = vrot.slane %v467, 1
          %v469 = vadd.f32 %v467, %v468
          %s470 = vtos %v469
          %v471 = vstv %s470
          %472 = vst [vmem:[%s201] sm:$0x1] %v471
        $region36: #{tpu_custom_call.1} parent=27 // pred_fallthru
          _
        %s473 = sand.u32 %s105, 1
        %s474 = scalar_lea.sflag [#allocation4], %s473
        %s475 = sand.u32 %s105, 1
        %s476 = scalar_lea.vmem [#allocation3], %s475
        // Predicated region
        $region37: #{tpu_custom_call.1} parent=27 // pred_check
          %p477 = pneg %p115
        $region38: #{tpu_custom_call.1} parent=27 // pred_check_branch
          %479 = sbr.rel (%p477) target = $region40
        $region39: #{tpu_custom_call.1} parent=27 // pred_region
          %s481 = ssub.s32 16, 16
          %482 = vsyncadd %s474, %s481
          %s483 = sadd.s32 %s22, %s21
          %s484 = smul.addr %s483, 16
          %s485 = scalar_lea.hbm %s2, %s484
          %s487 = sshll.u32 %s476, 4
          %s488 = int_to_ptr.vmem [resolvable:$true] %s487
          %490 = dma.vmem_to_hbm [thread:$0]  %s488, 16, %s485, %s474
        $region40: #{tpu_custom_call.1} parent=27 // pred_fallthru
          _
      $region28: #{tpu_custom_call.1} parent=5 // pred_fallthru
        _
      %p491 = scmp.le.s32.totalorder 2, %s11
      // Predicated region
      $region41: #{tpu_custom_call.1} parent=5 // pred_check
        %p492 = pneg %p491
      $region42: #{tpu_custom_call.1} parent=5 // pred_check_branch
        %494 = sbr.rel (%p492) target = $region44
      $region43: #{tpu_custom_call.1} parent=5 // pred_region
        %s495 = ssub.s32 %s11, 2
        // Predicated region
        $region45: #{tpu_custom_call.1} parent=43 // pred_check
          %p496 = pneg %p121
        $region46: #{tpu_custom_call.1} parent=43 // pred_check_branch
          %498 = sbr.rel (%p496) target = $region48
        $region47: #{tpu_custom_call.1} parent=43 // pred_region
          %s499 = sand.u32 %s106, 1
          %s500 = scalar_lea.sflag [#allocation4], %s499
          %s501 = sand.u32 %s106, 1
          %s502 = scalar_lea.vmem [#allocation3], %s501
          %503 = dma.done %s500, 16
        $region48: #{tpu_custom_call.1} parent=43 // pred_fallthru
          _
      $region44: #{tpu_custom_call.1} parent=5 // pred_fallthru
        _
    $region6: #{tpu_custom_call.1} parent=1 // loop_footer
      %s15 = sadd.s32 1, %s11
    $region7: #{tpu_custom_call.1} parent=1 // loop_footer_branch
      %10 = sbr.rel target = $region3
    $region8: #{tpu_custom_call.1} parent=1 // loop_exit
      _
    %504 = vsyncpa [#allocation4], 1
    %s505 = scalar_lea.sflag [#allocation4], 1
    %506 = vsyncpa %s505, 1

</llo_original>
